<compile_context>
chip_gen: v5e
topology: v5e:2x2
jax: 0.10.0
libtpu: 0.0.40
codegen_flags: <defaults>
</compile_context>

<pallas_src>
import functools
import math

import jax
import jax.numpy as jnp
from jax import lax
from jax.experimental import pallas as pl
from jax.experimental.pallas import tpu as pltpu


# ----------------------------------------------------------------------------
# Pallas kernels
# ----------------------------------------------------------------------------
def rnn_layer_kernel(x_ref, wi_ref, wh_ref, b_ref, out_ref, h_ref, *, tc, bsz):
    """One chunk (Tc steps) of a tanh RNN layer, full-sequence output.

    x_ref  : (Tc*B, D)  bf16  flattened time-major chunk of the layer input
    wi_ref : (D, H)     bf16  input->hidden weights (pre-transposed)
    wh_ref : (H, H)     bf16  hidden->hidden weights (pre-transposed)
    b_ref  : (1, H)     f32   combined bias (b_ih + b_hh)
    out_ref: (Tc*B, H)  bf16  hidden states for this chunk
    h_ref  : (B, H)     f32   VMEM scratch carrying h across chunks
    """
    c = pl.program_id(0)

    @pl.when(c == 0)
    def _():
        h_ref[...] = jnp.zeros_like(h_ref)

    # One chunk-wide input projection on the MXU: (Tc*B, D) @ (D, H) + b.
    gx = jnp.dot(x_ref[...], wi_ref[...],
                 preferred_element_type=jnp.float32) + b_ref[...]

    h = h_ref[...]
    for t in range(tc):  # unrolled; only h @ Wh stays on the serial path
        z = gx[t * bsz:(t + 1) * bsz, :] + jnp.dot(
            h.astype(jnp.bfloat16), wh_ref[...],
            preferred_element_type=jnp.float32)
        h = jnp.tanh(z)
        out_ref[t * bsz:(t + 1) * bsz, :] = h.astype(out_ref.dtype)
    h_ref[...] = h


def rnn_last_fc_kernel(x_ref, wi_ref, wh_ref, b_ref, wfc_ref, bfc_ref,
                       out_ref, h_ref, *, tc, bsz):
    """Last RNN layer fused with the final Linear.

    Does NOT write the (T, B, H) sequence: only carries h and, on the last
    chunk, writes out = h_{T-1} @ Wfc + b_fc  (shape (B, output_size)).
    """
    c = pl.program_id(0)

    @pl.when(c == 0)
    def _():
        h_ref[...] = jnp.zeros_like(h_ref)

    gx = jnp.dot(x_ref[...], wi_ref[...],
                 preferred_element_type=jnp.float32) + b_ref[...]

    h = h_ref[...]
    for t in range(tc):
        h = jnp.tanh(gx[t * bsz:(t + 1) * bsz, :] + jnp.dot(
            h.astype(jnp.bfloat16), wh_ref[...],
            preferred_element_type=jnp.float32))
    h_ref[...] = h

    @pl.when(c == pl.num_programs(0) - 1)
    def _():
        out_ref[...] = (jnp.dot(h, wfc_ref[...],
                                preferred_element_type=jnp.float32)
                        + bfc_ref[...]).astype(out_ref.dtype)


# ----------------------------------------------------------------------------
# Wrappers
# ----------------------------------------------------------------------------
def _choose_tc(T, B, tc_max=32):
    """Largest chunk length Tc <= tc_max dividing T whose (Tc*B) row-block is
    sublane-legal for bf16 tiles; falls back to a single chunk (always legal)."""
    for c in range(min(T, tc_max), 0, -1):
        if T % c == 0 and (c == T or (c * B) % 16 == 0):
            return c
    return T


def rnn_intermediate_layer(x_flat, wi, wh, b, *, T, B):
    """x_flat: (T*B, D) bf16 time-major flattened -> (T*B, H) bf16."""
    D = x_flat.shape[1]
    H = wh.shape[1]
    tc = _choose_tc(T, B)
    nc = T // tc
    return pl.pallas_call(
        functools.partial(rnn_layer_kernel, tc=tc, bsz=B),
        out_shape=jax.ShapeDtypeStruct((T * B, H), jnp.bfloat16),
        grid=(nc,),
        in_specs=[
            pl.BlockSpec((tc * B, D), lambda c: (c, 0)),
            pl.BlockSpec((D, H), lambda c: (0, 0)),
            pl.BlockSpec((H, H), lambda c: (0, 0)),
            pl.BlockSpec((1, H), lambda c: (0, 0)),
        ],
        out_specs=pl.BlockSpec((tc * B, H), lambda c: (c, 0)),
        scratch_shapes=[pltpu.VMEM((B, H), jnp.float32)],
        compiler_params=pltpu.CompilerParams(
            dimension_semantics=("arbitrary",)),
    )(x_flat, wi, wh, b)


def rnn_last_layer_fc(x_flat, wi, wh, b, w_fc, b_fc, *, T, B):
    """x_flat: (T*B, D) bf16 -> (B, output_size) f32 (fused last layer + FC)."""
    D = x_flat.shape[1]
    H = wh.shape[1]
    O = w_fc.shape[1]
    tc = _choose_tc(T, B)
    nc = T // tc
    return pl.pallas_call(
        functools.partial(rnn_last_fc_kernel, tc=tc, bsz=B),
        out_shape=jax.ShapeDtypeStruct((B, O), jnp.float32),
        grid=(nc,),
        in_specs=[
            pl.BlockSpec((tc * B, D), lambda c: (c, 0)),
            pl.BlockSpec((D, H), lambda c: (0, 0)),
            pl.BlockSpec((H, H), lambda c: (0, 0)),
            pl.BlockSpec((1, H), lambda c: (0, 0)),
            pl.BlockSpec((H, O), lambda c: (0, 0)),
            pl.BlockSpec((1, O), lambda c: (0, 0)),
        ],
        out_specs=pl.BlockSpec((B, O), lambda c: (0, 0)),
        scratch_shapes=[pltpu.VMEM((B, H), jnp.float32)],
        compiler_params=pltpu.CompilerParams(
            dimension_semantics=("arbitrary",)),
    )(x_flat, wi, wh, b, w_fc, b_fc)


def rnn_forward(x, prep):
    """Equivalent of RNN.forward: x is (B, T, input_size), batch_first."""
    B, T, _ = x.shape
    # time-major, flattened (T*B, D), bf16 for the MXU / halved HBM traffic
    h_seq = jnp.transpose(x, (1, 0, 2)).reshape(T * B, -1).astype(jnp.bfloat16)
    layers = prep["rnn"]
    for (wi, wh, b) in layers[:-1]:
        h_seq = rnn_intermediate_layer(h_seq, wi, wh, b, T=T, B=B)
    wi, wh, b = layers[-1]
    w_fc, b_fc = prep["fc"]
    return rnn_last_layer_fc(h_seq, wi, wh, b, w_fc, b_fc, T=T, B=B)


# ----------------------------------------------------------------------------
# Parameter init (PyTorch layout, U(-1/sqrt(H), 1/sqrt(H))) + one-time prep
# ----------------------------------------------------------------------------
def init_params(key, input_size, hidden_size, num_layers, output_size):
    k = 1.0 / math.sqrt(hidden_size)
    layers = []
    for l in range(num_layers):
        in_sz = input_size if l == 0 else hidden_size
        key, k1, k2, k3, k4 = jax.random.split(key, 5)
        w_ih = jax.random.uniform(k1, (hidden_size, in_sz), jnp.float32, -k, k)
        w_hh = jax.random.uniform(k2, (hidden_size, hidden_size), jnp.float32, -k, k)
        b_ih = jax.random.uniform(k3, (hidden_size,), jnp.float32, -k, k)
        b_hh = jax.random.uniform(k4, (hidden_size,), jnp.float32, -k, k)
        layers.append((w_ih, w_hh, b_ih, b_hh))
    key, k5, k6 = jax.random.split(key, 3)
    w_fc = jax.random.uniform(k5, (output_size, hidden_size), jnp.float32, -k, k)
    b_fc = jax.random.uniform(k6, (output_size,), jnp.float32, -k, k)
    return {"rnn": layers, "fc": (w_fc, b_fc)}


def prepare_params(params):
    """One-time layout prep: transpose weights, fold biases, bf16 MXU operands."""
    layers = []
    for (w_ih, w_hh, b_ih, b_hh) in params["rnn"]:
        layers.append((
            jnp.transpose(w_ih).astype(jnp.bfloat16),   # (D_in, H)
            jnp.transpose(w_hh).astype(jnp.bfloat16),   # (H, H)
            (b_ih + b_hh).reshape(1, -1),               # (1, H) f32
        ))
    w_fc, b_fc = params["fc"]
    return {"rnn": layers,
            "fc": (jnp.transpose(w_fc), b_fc.reshape(1, -1))}  # f32 FC


# ----------------------------------------------------------------------------
# Pure-JAX f32 reference (same math as nn.RNN with tanh) for correctness check
# ----------------------------------------------------------------------------
def rnn_forward_ref(x, params):
    B = x.shape[0]
    seq = x
    for (w_ih, w_hh, b_ih, b_hh) in params["rnn"]:
        H = w_hh.shape[0]

        def step(h, x_t):
            h_new = jnp.tanh(x_t @ w_ih.T + b_ih + h @ w_hh.T + b_hh)
            return h_new, h_new

        h0 = jnp.zeros((B, H), jnp.float32)
        _, outs = lax.scan(step, h0, jnp.transpose(seq, (1, 0, 2)))
        seq = jnp.transpose(outs, (1, 0, 2))
    h_last = seq[:, -1, :]
    w_fc, b_fc = params["fc"]
    return h_last @ w_fc.T + b_fc


# ----------------------------------------------------------------------------
if __name__ == "__main__":
    batch, seq_len = 2, 8
    input_size, hidden_size, num_layers, output_size = 16, 32, 2, 8

    key = jax.random.PRNGKey(0)
    key, xk, pk = jax.random.split(key, 3)
    x = jax.random.normal(xk, (batch, seq_len, input_size), dtype=jnp.float32)
    params = init_params(pk, input_size, hidden_size, num_layers, output_size)
    prep = prepare_params(params)

    fwd = jax.jit(rnn_forward)
    out = jax.block_until_ready(fwd(x, prep))
    ref = jax.block_until_ready(rnn_forward_ref(x, params))

    assert out.shape == (batch, output_size)
    # bf16 MXU path: compare against the f32 reference with loosened tolerance.
    assert jnp.allclose(out, ref, atol=5e-2, rtol=5e-2), \
        "mismatch vs pure-JAX reference"

    print("KERNEL_OK")
</pallas_src>

<mosaic_0001>
module attributes {stable_mosaic.version = 11 : i64} {
  func.func @rnn_last_fc_kernel(%arg0: i32, %arg1: memref<16x32xbf16, #tpu.memory_space<vmem>>, %arg2: memref<32x32xbf16, #tpu.memory_space<vmem>>, %arg3: memref<32x32xbf16, #tpu.memory_space<vmem>>, %arg4: memref<1x32xf32, #tpu.memory_space<vmem>>, %arg5: memref<32x8xf32, #tpu.memory_space<vmem>>, %arg6: memref<1x8xf32, #tpu.memory_space<vmem>>, %arg7: memref<2x8xf32, #tpu.memory_space<vmem>>, %arg8: memref<2x32xf32, #tpu.memory_space<vmem>>) attributes {dimension_semantics = [#tpu.dimension_semantics<arbitrary>], iteration_bounds = array<i64: 1>, scalar_prefetch = 0 : i64, scratch_operands = 1 : i64, tpu.core_type = #tpu.core_type<tc>, window_params = [{transform_indices = @transform_0, window_bounds = array<i64: 16, 32>}, {pipeline_mode = #tpu.pipeline_mode<synchronous>, transform_indices = @transform_1, window_bounds = array<i64: 32, 32>}, {pipeline_mode = #tpu.pipeline_mode<synchronous>, transform_indices = @transform_2, window_bounds = array<i64: 32, 32>}, {pipeline_mode = #tpu.pipeline_mode<synchronous>, transform_indices = @transform_3, window_bounds = array<i64: 1, 32>}, {pipeline_mode = #tpu.pipeline_mode<synchronous>, transform_indices = @transform_4, window_bounds = array<i64: 32, 8>}, {pipeline_mode = #tpu.pipeline_mode<synchronous>, transform_indices = @transform_5, window_bounds = array<i64: 1, 8>}, {pipeline_mode = #tpu.pipeline_mode<synchronous>, transform_indices = @transform_6, window_bounds = array<i64: 2, 8>}]} {
    %c0_i32 = arith.constant 0 : i32
    %0 = arith.cmpi eq, %arg0, %c0_i32 : i32
    %1 = arith.extui %0 : i1 to i32
    %c0_i32_0 = arith.constant 0 : i32
    %2 = arith.cmpi ne, %1, %c0_i32_0 : i32
    scf.if %2 {
      %cst_36 = arith.constant 0.000000e+00 : f32
      %62 = vector.broadcast %cst_36 : f32 to vector<2x32xf32>
      %c0_37 = arith.constant 0 : index
      %c0_38 = arith.constant 0 : index
      %63 = vector.load %arg8[%c0_37, %c0_38] : memref<2x32xf32, #tpu.memory_space<vmem>>, vector<2x32xf32>
      tpu.vector_store %arg8[%c0_37, %c0_38], %62 {strides = array<i32>} : memref<2x32xf32, #tpu.memory_space<vmem>>, vector<2x32xf32>,
    } else {
    }
    %c0 = arith.constant 0 : index
    %c0_1 = arith.constant 0 : index
    %3 = vector.load %arg1[%c0, %c0_1] : memref<16x32xbf16, #tpu.memory_space<vmem>>, vector<16x32xbf16>
    %c0_2 = arith.constant 0 : index
    %c0_3 = arith.constant 0 : index
    %4 = vector.load %arg2[%c0_2, %c0_3] : memref<32x32xbf16, #tpu.memory_space<vmem>>, vector<32x32xbf16>
    %cst = arith.constant dense<0.000000e+00> : vector<16x32xf32>
    %5 = tpu.matmul %3, %4, %cst {dimension_numbers = #tpu.dot_dimension_numbers<[1], [0], [0], [1], [0, 0, 1, 1], [], []>} : vector<16x32xbf16>, vector<32x32xbf16>, vector<16x32xf32> -> vector<16x32xf32>
    %c0_4 = arith.constant 0 : index
    %c0_5 = arith.constant 0 : index
    %6 = vector.load %arg4[%c0_4, %c0_5] : memref<1x32xf32, #tpu.memory_space<vmem>>, vector<1x32xf32>
    %7 = vector.broadcast %6 : vector<1x32xf32> to vector<16x32xf32>
    %8 = arith.addf %5, %7 : vector<16x32xf32>
    %c0_6 = arith.constant 0 : index
    %c0_7 = arith.constant 0 : index
    %9 = vector.load %arg8[%c0_6, %c0_7] : memref<2x32xf32, #tpu.memory_space<vmem>>, vector<2x32xf32>
    %10 = vector.extract_strided_slice %8 {offsets = [0, 0], sizes = [2, 32], strides = [1, 1]} : vector<16x32xf32> to vector<2x32xf32>
    %11 = arith.truncf %9 : vector<2x32xf32> to vector<2x32xbf16>
    %c0_8 = arith.constant 0 : index
    %c0_9 = arith.constant 0 : index
    %12 = vector.load %arg3[%c0_8, %c0_9] : memref<32x32xbf16, #tpu.memory_space<vmem>>, vector<32x32xbf16>
    %cst_10 = arith.constant dense<0.000000e+00> : vector<2x32xf32>
    %13 = tpu.matmul %11, %12, %cst_10 {dimension_numbers = #tpu.dot_dimension_numbers<[1], [0], [0], [1], [0, 0, 1, 1], [], []>} : vector<2x32xbf16>, vector<32x32xbf16>, vector<2x32xf32> -> vector<2x32xf32>
    %14 = arith.addf %10, %13 : vector<2x32xf32>
    %15 = math.tanh %14 : vector<2x32xf32>
    %16 = vector.extract_strided_slice %8 {offsets = [2, 0], sizes = [2, 32], strides = [1, 1]} : vector<16x32xf32> to vector<2x32xf32>
    %17 = arith.truncf %15 : vector<2x32xf32> to vector<2x32xbf16>
    %c0_11 = arith.constant 0 : index
    %c0_12 = arith.constant 0 : index
    %18 = vector.load %arg3[%c0_11, %c0_12] : memref<32x32xbf16, #tpu.memory_space<vmem>>, vector<32x32xbf16>
    %cst_13 = arith.constant dense<0.000000e+00> : vector<2x32xf32>
    %19 = tpu.matmul %17, %18, %cst_13 {dimension_numbers = #tpu.dot_dimension_numbers<[1], [0], [0], [1], [0, 0, 1, 1], [], []>} : vector<2x32xbf16>, vector<32x32xbf16>, vector<2x32xf32> -> vector<2x32xf32>
    %20 = arith.addf %16, %19 : vector<2x32xf32>
    %21 = math.tanh %20 : vector<2x32xf32>
    %22 = vector.extract_strided_slice %8 {offsets = [4, 0], sizes = [2, 32], strides = [1, 1]} : vector<16x32xf32> to vector<2x32xf32>
    %23 = arith.truncf %21 : vector<2x32xf32> to vector<2x32xbf16>
    %c0_14 = arith.constant 0 : index
    %c0_15 = arith.constant 0 : index
    %24 = vector.load %arg3[%c0_14, %c0_15] : memref<32x32xbf16, #tpu.memory_space<vmem>>, vector<32x32xbf16>
    %cst_16 = arith.constant dense<0.000000e+00> : vector<2x32xf32>
    %25 = tpu.matmul %23, %24, %cst_16 {dimension_numbers = #tpu.dot_dimension_numbers<[1], [0], [0], [1], [0, 0, 1, 1], [], []>} : vector<2x32xbf16>, vector<32x32xbf16>, vector<2x32xf32> -> vector<2x32xf32>
    %26 = arith.addf %22, %25 : vector<2x32xf32>
    %27 = math.tanh %26 : vector<2x32xf32>
    %28 = vector.extract_strided_slice %8 {offsets = [6, 0], sizes = [2, 32], strides = [1, 1]} : vector<16x32xf32> to vector<2x32xf32>
    %29 = arith.truncf %27 : vector<2x32xf32> to vector<2x32xbf16>
    %c0_17 = arith.constant 0 : index
    %c0_18 = arith.constant 0 : index
    %30 = vector.load %arg3[%c0_17, %c0_18] : memref<32x32xbf16, #tpu.memory_space<vmem>>, vector<32x32xbf16>
    %cst_19 = arith.constant dense<0.000000e+00> : vector<2x32xf32>
    %31 = tpu.matmul %29, %30, %cst_19 {dimension_numbers = #tpu.dot_dimension_numbers<[1], [0], [0], [1], [0, 0, 1, 1], [], []>} : vector<2x32xbf16>, vector<32x32xbf16>, vector<2x32xf32> -> vector<2x32xf32>
    %32 = arith.addf %28, %31 : vector<2x32xf32>
    %33 = math.tanh %32 : vector<2x32xf32>
    %34 = vector.extract_strided_slice %8 {offsets = [8, 0], sizes = [2, 32], strides = [1, 1]} : vector<16x32xf32> to vector<2x32xf32>
    %35 = arith.truncf %33 : vector<2x32xf32> to vector<2x32xbf16>
    %c0_20 = arith.constant 0 : index
    %c0_21 = arith.constant 0 : index
    %36 = vector.load %arg3[%c0_20, %c0_21] : memref<32x32xbf16, #tpu.memory_space<vmem>>, vector<32x32xbf16>
    %cst_22 = arith.constant dense<0.000000e+00> : vector<2x32xf32>
    %37 = tpu.matmul %35, %36, %cst_22 {dimension_numbers = #tpu.dot_dimension_numbers<[1], [0], [0], [1], [0, 0, 1, 1], [], []>} : vector<2x32xbf16>, vector<32x32xbf16>, vector<2x32xf32> -> vector<2x32xf32>
    %38 = arith.addf %34, %37 : vector<2x32xf32>
    %39 = math.tanh %38 : vector<2x32xf32>
    %40 = vector.extract_strided_slice %8 {offsets = [10, 0], sizes = [2, 32], strides = [1, 1]} : vector<16x32xf32> to vector<2x32xf32>
    %41 = arith.truncf %39 : vector<2x32xf32> to vector<2x32xbf16>
    %c0_23 = arith.constant 0 : index
    %c0_24 = arith.constant 0 : index
    %42 = vector.load %arg3[%c0_23, %c0_24] : memref<32x32xbf16, #tpu.memory_space<vmem>>, vector<32x32xbf16>
    %cst_25 = arith.constant dense<0.000000e+00> : vector<2x32xf32>
    %43 = tpu.matmul %41, %42, %cst_25 {dimension_numbers = #tpu.dot_dimension_numbers<[1], [0], [0], [1], [0, 0, 1, 1], [], []>} : vector<2x32xbf16>, vector<32x32xbf16>, vector<2x32xf32> -> vector<2x32xf32>
    %44 = arith.addf %40, %43 : vector<2x32xf32>
    %45 = math.tanh %44 : vector<2x32xf32>
    %46 = vector.extract_strided_slice %8 {offsets = [12, 0], sizes = [2, 32], strides = [1, 1]} : vector<16x32xf32> to vector<2x32xf32>
    %47 = arith.truncf %45 : vector<2x32xf32> to vector<2x32xbf16>
    %c0_26 = arith.constant 0 : index
    %c0_27 = arith.constant 0 : index
    %48 = vector.load %arg3[%c0_26, %c0_27] : memref<32x32xbf16, #tpu.memory_space<vmem>>, vector<32x32xbf16>
    %cst_28 = arith.constant dense<0.000000e+00> : vector<2x32xf32>
    %49 = tpu.matmul %47, %48, %cst_28 {dimension_numbers = #tpu.dot_dimension_numbers<[1], [0], [0], [1], [0, 0, 1, 1], [], []>} : vector<2x32xbf16>, vector<32x32xbf16>, vector<2x32xf32> -> vector<2x32xf32>
    %50 = arith.addf %46, %49 : vector<2x32xf32>
    %51 = math.tanh %50 : vector<2x32xf32>
    %52 = vector.extract_strided_slice %8 {offsets = [14, 0], sizes = [2, 32], strides = [1, 1]} : vector<16x32xf32> to vector<2x32xf32>
    %53 = arith.truncf %51 : vector<2x32xf32> to vector<2x32xbf16>
    %c0_29 = arith.constant 0 : index
    %c0_30 = arith.constant 0 : index
    %54 = vector.load %arg3[%c0_29, %c0_30] : memref<32x32xbf16, #tpu.memory_space<vmem>>, vector<32x32xbf16>
    %cst_31 = arith.constant dense<0.000000e+00> : vector<2x32xf32>
    %55 = tpu.matmul %53, %54, %cst_31 {dimension_numbers = #tpu.dot_dimension_numbers<[1], [0], [0], [1], [0, 0, 1, 1], [], []>} : vector<2x32xbf16>, vector<32x32xbf16>, vector<2x32xf32> -> vector<2x32xf32>
    %56 = arith.addf %52, %55 : vector<2x32xf32>
    %57 = math.tanh %56 : vector<2x32xf32>
    %c0_32 = arith.constant 0 : index
    %c0_33 = arith.constant 0 : index
    %58 = vector.load %arg8[%c0_32, %c0_33] : memref<2x32xf32, #tpu.memory_space<vmem>>, vector<2x32xf32>
    tpu.vector_store %arg8[%c0_32, %c0_33], %57 {strides = array<i32>} : memref<2x32xf32, #tpu.memory_space<vmem>>, vector<2x32xf32>,
    %c0_i32_34 = arith.constant 0 : i32
    %59 = arith.cmpi eq, %arg0, %c0_i32_34 : i32
    %60 = arith.extui %59 : i1 to i32
    %c0_i32_35 = arith.constant 0 : i32
    %61 = arith.cmpi ne, %60, %c0_i32_35 : i32
    scf.if %61 {
      %c0_36 = arith.constant 0 : index
      %c0_37 = arith.constant 0 : index
      %62 = vector.load %arg5[%c0_36, %c0_37] : memref<32x8xf32, #tpu.memory_space<vmem>>, vector<32x8xf32>
      %cst_38 = arith.constant dense<0.000000e+00> : vector<2x8xf32>
      %63 = tpu.matmul %57, %62, %cst_38 {dimension_numbers = #tpu.dot_dimension_numbers<[1], [0], [0], [1], [0, 0, 1, 1], [], []>} : vector<2x32xf32>, vector<32x8xf32>, vector<2x8xf32> -> vector<2x8xf32>
      %c0_39 = arith.constant 0 : index
      %c0_40 = arith.constant 0 : index
      %64 = vector.load %arg6[%c0_39, %c0_40] : memref<1x8xf32, #tpu.memory_space<vmem>>, vector<1x8xf32>
      %65 = vector.broadcast %64 : vector<1x8xf32> to vector<2x8xf32>
      %66 = arith.addf %63, %65 : vector<2x8xf32>
      %c0_41 = arith.constant 0 : index
      %c0_42 = arith.constant 0 : index
      %67 = vector.load %arg7[%c0_41, %c0_42] : memref<2x8xf32, #tpu.memory_space<vmem>>, vector<2x8xf32>
      tpu.vector_store %arg7[%c0_41, %c0_42], %66 {strides = array<i32>} : memref<2x8xf32, #tpu.memory_space<vmem>>, vector<2x8xf32>,
    } else {
    }
    return
  }
  func.func @transform_0(%arg0: i32) -> (i32, i32) {
    %c0_i32 = arith.constant 0 : i32
    %c0_i32_0 = arith.constant 0 : i32
    return %arg0, %c0_i32 : i32, i32
  }
  func.func @transform_1(%arg0: i32) -> (i32, i32) {
    %c0_i32 = arith.constant 0 : i32
    %c0_i32_0 = arith.constant 0 : i32
    %c0_i32_1 = arith.constant 0 : i32
    return %c0_i32, %c0_i32_0 : i32, i32
  }
  func.func @transform_2(%arg0: i32) -> (i32, i32) {
    %c0_i32 = arith.constant 0 : i32
    %c0_i32_0 = arith.constant 0 : i32
    %c0_i32_1 = arith.constant 0 : i32
    return %c0_i32, %c0_i32_0 : i32, i32
  }
  func.func @transform_3(%arg0: i32) -> (i32, i32) {
    %c0_i32 = arith.constant 0 : i32
    %c0_i32_0 = arith.constant 0 : i32
    %c0_i32_1 = arith.constant 0 : i32
    return %c0_i32, %c0_i32_0 : i32, i32
  }
  func.func @transform_4(%arg0: i32) -> (i32, i32) {
    %c0_i32 = arith.constant 0 : i32
    %c0_i32_0 = arith.constant 0 : i32
    %c0_i32_1 = arith.constant 0 : i32
    return %c0_i32, %c0_i32_0 : i32, i32
  }
  func.func @transform_5(%arg0: i32) -> (i32, i32) {
    %c0_i32 = arith.constant 0 : i32
    %c0_i32_0 = arith.constant 0 : i32
    %c0_i32_1 = arith.constant 0 : i32
    return %c0_i32, %c0_i32_0 : i32, i32
  }
  func.func @transform_6(%arg0: i32) -> (i32, i32) {
    %c0_i32 = arith.constant 0 : i32
    %c0_i32_0 = arith.constant 0 : i32
    %c0_i32_1 = arith.constant 0 : i32
    return %c0_i32, %c0_i32_0 : i32, i32
  }
}

module attributes {stable_mosaic.version = 11 : i64} {
  func.func @rnn_layer_kernel(%arg0: i32, %arg1: memref<16x16xbf16, #tpu.memory_space<vmem>>, %arg2: memref<16x32xbf16, #tpu.memory_space<vmem>>, %arg3: memref<32x32xbf16, #tpu.memory_space<vmem>>, %arg4: memref<1x32xf32, #tpu.memory_space<vmem>>, %arg5: memref<16x32xbf16, #tpu.memory_space<vmem>>, %arg6: memref<2x32xf32, #tpu.memory_space<vmem>>) attributes {dimension_semantics = [#tpu.dimension_semantics<arbitrary>], iteration_bounds = array<i64: 1>, scalar_prefetch = 0 : i64, scratch_operands = 1 : i64, tpu.core_type = #tpu.core_type<tc>, window_params = [{transform_indices = @transform_0, window_bounds = array<i64: 16, 16>}, {pipeline_mode = #tpu.pipeline_mode<synchronous>, transform_indices = @transform_1, window_bounds = array<i64: 16, 32>}, {pipeline_mode = #tpu.pipeline_mode<synchronous>, transform_indices = @transform_2, window_bounds = array<i64: 32, 32>}, {pipeline_mode = #tpu.pipeline_mode<synchronous>, transform_indices = @transform_3, window_bounds = array<i64: 1, 32>}, {transform_indices = @transform_4, window_bounds = array<i64: 16, 32>}]} {
    %c0_i32 = arith.constant 0 : i32
    %0 = arith.cmpi eq, %arg0, %c0_i32 : i32
    %1 = arith.extui %0 : i1 to i32
    %c0_i32_0 = arith.constant 0 : i32
    %2 = arith.cmpi ne, %1, %c0_i32_0 : i32
    scf.if %2 {
      %cst_43 = arith.constant 0.000000e+00 : f32
      %75 = vector.broadcast %cst_43 : f32 to vector<2x32xf32>
      %c0_44 = arith.constant 0 : index
      %c0_45 = arith.constant 0 : index
      %76 = vector.load %arg6[%c0_44, %c0_45] : memref<2x32xf32, #tpu.memory_space<vmem>>, vector<2x32xf32>
      tpu.vector_store %arg6[%c0_44, %c0_45], %75 {strides = array<i32>} : memref<2x32xf32, #tpu.memory_space<vmem>>, vector<2x32xf32>,
    } else {
    }
    %c0 = arith.constant 0 : index
    %c0_1 = arith.constant 0 : index
    %3 = vector.load %arg1[%c0, %c0_1] : memref<16x16xbf16, #tpu.memory_space<vmem>>, vector<16x16xbf16>
    %c0_2 = arith.constant 0 : index
    %c0_3 = arith.constant 0 : index
    %4 = vector.load %arg2[%c0_2, %c0_3] : memref<16x32xbf16, #tpu.memory_space<vmem>>, vector<16x32xbf16>
    %cst = arith.constant dense<0.000000e+00> : vector<16x32xf32>
    %5 = tpu.matmul %3, %4, %cst {dimension_numbers = #tpu.dot_dimension_numbers<[1], [0], [0], [1], [0, 0, 1, 1], [], []>} : vector<16x16xbf16>, vector<16x32xbf16>, vector<16x32xf32> -> vector<16x32xf32>
    %c0_4 = arith.constant 0 : index
    %c0_5 = arith.constant 0 : index
    %6 = vector.load %arg4[%c0_4, %c0_5] : memref<1x32xf32, #tpu.memory_space<vmem>>, vector<1x32xf32>
    %7 = vector.broadcast %6 : vector<1x32xf32> to vector<16x32xf32>
    %8 = arith.addf %5, %7 : vector<16x32xf32>
    %c0_6 = arith.constant 0 : index
    %c0_7 = arith.constant 0 : index
    %9 = vector.load %arg6[%c0_6, %c0_7] : memref<2x32xf32, #tpu.memory_space<vmem>>, vector<2x32xf32>
    %10 = vector.extract_strided_slice %8 {offsets = [0, 0], sizes = [2, 32], strides = [1, 1]} : vector<16x32xf32> to vector<2x32xf32>
    %11 = arith.truncf %9 : vector<2x32xf32> to vector<2x32xbf16>
    %c0_8 = arith.constant 0 : index
    %c0_9 = arith.constant 0 : index
    %12 = vector.load %arg3[%c0_8, %c0_9] : memref<32x32xbf16, #tpu.memory_space<vmem>>, vector<32x32xbf16>
    %cst_10 = arith.constant dense<0.000000e+00> : vector<2x32xf32>
    %13 = tpu.matmul %11, %12, %cst_10 {dimension_numbers = #tpu.dot_dimension_numbers<[1], [0], [0], [1], [0, 0, 1, 1], [], []>} : vector<2x32xbf16>, vector<32x32xbf16>, vector<2x32xf32> -> vector<2x32xf32>
    %14 = arith.addf %10, %13 : vector<2x32xf32>
    %15 = math.tanh %14 : vector<2x32xf32>
    %16 = arith.truncf %15 : vector<2x32xf32> to vector<2x32xbf16>
    %c0_11 = arith.constant 0 : index
    %c0_12 = arith.constant 0 : index
    %17 = vector.load %arg5[%c0_11, %c0_12] : memref<16x32xbf16, #tpu.memory_space<vmem>>, vector<2x32xbf16>
    tpu.vector_store %arg5[%c0_11, %c0_12], %16 {strides = array<i32>} : memref<16x32xbf16, #tpu.memory_space<vmem>>, vector<2x32xbf16>,
    %18 = vector.extract_strided_slice %8 {offsets = [2, 0], sizes = [2, 32], strides = [1, 1]} : vector<16x32xf32> to vector<2x32xf32>
    %19 = arith.truncf %15 : vector<2x32xf32> to vector<2x32xbf16>
    %c0_13 = arith.constant 0 : index
    %c0_14 = arith.constant 0 : index
    %20 = vector.load %arg3[%c0_13, %c0_14] : memref<32x32xbf16, #tpu.memory_space<vmem>>, vector<32x32xbf16>
    %cst_15 = arith.constant dense<0.000000e+00> : vector<2x32xf32>
    %21 = tpu.matmul %19, %20, %cst_15 {dimension_numbers = #tpu.dot_dimension_numbers<[1], [0], [0], [1], [0, 0, 1, 1], [], []>} : vector<2x32xbf16>, vector<32x32xbf16>, vector<2x32xf32> -> vector<2x32xf32>
    %22 = arith.addf %18, %21 : vector<2x32xf32>
    %23 = math.tanh %22 : vector<2x32xf32>
    %24 = arith.truncf %23 : vector<2x32xf32> to vector<2x32xbf16>
    %c2 = arith.constant 2 : index
    %c0_16 = arith.constant 0 : index
    %25 = vector.load %arg5[%c2, %c0_16] : memref<16x32xbf16, #tpu.memory_space<vmem>>, vector<2x32xbf16>
    tpu.vector_store %arg5[%c2, %c0_16], %24 {strides = array<i32>} : memref<16x32xbf16, #tpu.memory_space<vmem>>, vector<2x32xbf16>,
    %26 = vector.extract_strided_slice %8 {offsets = [4, 0], sizes = [2, 32], strides = [1, 1]} : vector<16x32xf32> to vector<2x32xf32>
    %27 = arith.truncf %23 : vector<2x32xf32> to vector<2x32xbf16>
    %c0_17 = arith.constant 0 : index
    %c0_18 = arith.constant 0 : index
    %28 = vector.load %arg3[%c0_17, %c0_18] : memref<32x32xbf16, #tpu.memory_space<vmem>>, vector<32x32xbf16>
    %cst_19 = arith.constant dense<0.000000e+00> : vector<2x32xf32>
    %29 = tpu.matmul %27, %28, %cst_19 {dimension_numbers = #tpu.dot_dimension_numbers<[1], [0], [0], [1], [0, 0, 1, 1], [], []>} : vector<2x32xbf16>, vector<32x32xbf16>, vector<2x32xf32> -> vector<2x32xf32>
    %30 = arith.addf %26, %29 : vector<2x32xf32>
    %31 = math.tanh %30 : vector<2x32xf32>
    %32 = arith.truncf %31 : vector<2x32xf32> to vector<2x32xbf16>
    %c4 = arith.constant 4 : index
    %c0_20 = arith.constant 0 : index
    %33 = vector.load %arg5[%c4, %c0_20] : memref<16x32xbf16, #tpu.memory_space<vmem>>, vector<2x32xbf16>
    tpu.vector_store %arg5[%c4, %c0_20], %32 {strides = array<i32>} : memref<16x32xbf16, #tpu.memory_space<vmem>>, vector<2x32xbf16>,
    %34 = vector.extract_strided_slice %8 {offsets = [6, 0], sizes = [2, 32], strides = [1, 1]} : vector<16x32xf32> to vector<2x32xf32>
    %35 = arith.truncf %31 : vector<2x32xf32> to vector<2x32xbf16>
    %c0_21 = arith.constant 0 : index
    %c0_22 = arith.constant 0 : index
    %36 = vector.load %arg3[%c0_21, %c0_22] : memref<32x32xbf16, #tpu.memory_space<vmem>>, vector<32x32xbf16>
    %cst_23 = arith.constant dense<0.000000e+00> : vector<2x32xf32>
    %37 = tpu.matmul %35, %36, %cst_23 {dimension_numbers = #tpu.dot_dimension_numbers<[1], [0], [0], [1], [0, 0, 1, 1], [], []>} : vector<2x32xbf16>, vector<32x32xbf16>, vector<2x32xf32> -> vector<2x32xf32>
    %38 = arith.addf %34, %37 : vector<2x32xf32>
    %39 = math.tanh %38 : vector<2x32xf32>
    %40 = arith.truncf %39 : vector<2x32xf32> to vector<2x32xbf16>
    %c6 = arith.constant 6 : index
    %c0_24 = arith.constant 0 : index
    %41 = vector.load %arg5[%c6, %c0_24] : memref<16x32xbf16, #tpu.memory_space<vmem>>, vector<2x32xbf16>
    tpu.vector_store %arg5[%c6, %c0_24], %40 {strides = array<i32>} : memref<16x32xbf16, #tpu.memory_space<vmem>>, vector<2x32xbf16>,
    %42 = vector.extract_strided_slice %8 {offsets = [8, 0], sizes = [2, 32], strides = [1, 1]} : vector<16x32xf32> to vector<2x32xf32>
    %43 = arith.truncf %39 : vector<2x32xf32> to vector<2x32xbf16>
    %c0_25 = arith.constant 0 : index
    %c0_26 = arith.constant 0 : index
    %44 = vector.load %arg3[%c0_25, %c0_26] : memref<32x32xbf16, #tpu.memory_space<vmem>>, vector<32x32xbf16>
    %cst_27 = arith.constant dense<0.000000e+00> : vector<2x32xf32>
    %45 = tpu.matmul %43, %44, %cst_27 {dimension_numbers = #tpu.dot_dimension_numbers<[1], [0], [0], [1], [0, 0, 1, 1], [], []>} : vector<2x32xbf16>, vector<32x32xbf16>, vector<2x32xf32> -> vector<2x32xf32>
    %46 = arith.addf %42, %45 : vector<2x32xf32>
    %47 = math.tanh %46 : vector<2x32xf32>
    %48 = arith.truncf %47 : vector<2x32xf32> to vector<2x32xbf16>
    %c8 = arith.constant 8 : index
    %c0_28 = arith.constant 0 : index
    %49 = vector.load %arg5[%c8, %c0_28] : memref<16x32xbf16, #tpu.memory_space<vmem>>, vector<2x32xbf16>
    tpu.vector_store %arg5[%c8, %c0_28], %48 {strides = array<i32>} : memref<16x32xbf16, #tpu.memory_space<vmem>>, vector<2x32xbf16>,
    %50 = vector.extract_strided_slice %8 {offsets = [10, 0], sizes = [2, 32], strides = [1, 1]} : vector<16x32xf32> to vector<2x32xf32>
    %51 = arith.truncf %47 : vector<2x32xf32> to vector<2x32xbf16>
    %c0_29 = arith.constant 0 : index
    %c0_30 = arith.constant 0 : index
    %52 = vector.load %arg3[%c0_29, %c0_30] : memref<32x32xbf16, #tpu.memory_space<vmem>>, vector<32x32xbf16>
    %cst_31 = arith.constant dense<0.000000e+00> : vector<2x32xf32>
    %53 = tpu.matmul %51, %52, %cst_31 {dimension_numbers = #tpu.dot_dimension_numbers<[1], [0], [0], [1], [0, 0, 1, 1], [], []>} : vector<2x32xbf16>, vector<32x32xbf16>, vector<2x32xf32> -> vector<2x32xf32>
    %54 = arith.addf %50, %53 : vector<2x32xf32>
    %55 = math.tanh %54 : vector<2x32xf32>
    %56 = arith.truncf %55 : vector<2x32xf32> to vector<2x32xbf16>
    %c10 = arith.constant 10 : index
    %c0_32 = arith.constant 0 : index
    %57 = vector.load %arg5[%c10, %c0_32] : memref<16x32xbf16, #tpu.memory_space<vmem>>, vector<2x32xbf16>
    tpu.vector_store %arg5[%c10, %c0_32], %56 {strides = array<i32>} : memref<16x32xbf16, #tpu.memory_space<vmem>>, vector<2x32xbf16>,
    %58 = vector.extract_strided_slice %8 {offsets = [12, 0], sizes = [2, 32], strides = [1, 1]} : vector<16x32xf32> to vector<2x32xf32>
    %59 = arith.truncf %55 : vector<2x32xf32> to vector<2x32xbf16>
    %c0_33 = arith.constant 0 : index
    %c0_34 = arith.constant 0 : index
    %60 = vector.load %arg3[%c0_33, %c0_34] : memref<32x32xbf16, #tpu.memory_space<vmem>>, vector<32x32xbf16>
    %cst_35 = arith.constant dense<0.000000e+00> : vector<2x32xf32>
    %61 = tpu.matmul %59, %60, %cst_35 {dimension_numbers = #tpu.dot_dimension_numbers<[1], [0], [0], [1], [0, 0, 1, 1], [], []>} : vector<2x32xbf16>, vector<32x32xbf16>, vector<2x32xf32> -> vector<2x32xf32>
    %62 = arith.addf %58, %61 : vector<2x32xf32>
    %63 = math.tanh %62 : vector<2x32xf32>
    %64 = arith.truncf %63 : vector<2x32xf32> to vector<2x32xbf16>
    %c12 = arith.constant 12 : index
    %c0_36 = arith.constant 0 : index
    %65 = vector.load %arg5[%c12, %c0_36] : memref<16x32xbf16, #tpu.memory_space<vmem>>, vector<2x32xbf16>
    tpu.vector_store %arg5[%c12, %c0_36], %64 {strides = array<i32>} : memref<16x32xbf16, #tpu.memory_space<vmem>>, vector<2x32xbf16>,
    %66 = vector.extract_strided_slice %8 {offsets = [14, 0], sizes = [2, 32], strides = [1, 1]} : vector<16x32xf32> to vector<2x32xf32>
    %67 = arith.truncf %63 : vector<2x32xf32> to vector<2x32xbf16>
    %c0_37 = arith.constant 0 : index
    %c0_38 = arith.constant 0 : index
    %68 = vector.load %arg3[%c0_37, %c0_38] : memref<32x32xbf16, #tpu.memory_space<vmem>>, vector<32x32xbf16>
    %cst_39 = arith.constant dense<0.000000e+00> : vector<2x32xf32>
    %69 = tpu.matmul %67, %68, %cst_39 {dimension_numbers = #tpu.dot_dimension_numbers<[1], [0], [0], [1], [0, 0, 1, 1], [], []>} : vector<2x32xbf16>, vector<32x32xbf16>, vector<2x32xf32> -> vector<2x32xf32>
    %70 = arith.addf %66, %69 : vector<2x32xf32>
    %71 = math.tanh %70 : vector<2x32xf32>
    %72 = arith.truncf %71 : vector<2x32xf32> to vector<2x32xbf16>
    %c14 = arith.constant 14 : index
    %c0_40 = arith.constant 0 : index
    %73 = vector.load %arg5[%c14, %c0_40] : memref<16x32xbf16, #tpu.memory_space<vmem>>, vector<2x32xbf16>
    tpu.vector_store %arg5[%c14, %c0_40], %72 {strides = array<i32>} : memref<16x32xbf16, #tpu.memory_space<vmem>>, vector<2x32xbf16>,
    %c0_41 = arith.constant 0 : index
    %c0_42 = arith.constant 0 : index
    %74 = vector.load %arg6[%c0_41, %c0_42] : memref<2x32xf32, #tpu.memory_space<vmem>>, vector<2x32xf32>
    tpu.vector_store %arg6[%c0_41, %c0_42], %71 {strides = array<i32>} : memref<2x32xf32, #tpu.memory_space<vmem>>, vector<2x32xf32>,
    return
  }
  func.func @transform_0(%arg0: i32) -> (i32, i32) {
    %c0_i32 = arith.constant 0 : i32
    %c0_i32_0 = arith.constant 0 : i32
    return %arg0, %c0_i32 : i32, i32
  }
  func.func @transform_1(%arg0: i32) -> (i32, i32) {
    %c0_i32 = arith.constant 0 : i32
    %c0_i32_0 = arith.constant 0 : i32
    %c0_i32_1 = arith.constant 0 : i32
    return %c0_i32, %c0_i32_0 : i32, i32
  }
  func.func @transform_2(%arg0: i32) -> (i32, i32) {
    %c0_i32 = arith.constant 0 : i32
    %c0_i32_0 = arith.constant 0 : i32
    %c0_i32_1 = arith.constant 0 : i32
    return %c0_i32, %c0_i32_0 : i32, i32
  }
  func.func @transform_3(%arg0: i32) -> (i32, i32) {
    %c0_i32 = arith.constant 0 : i32
    %c0_i32_0 = arith.constant 0 : i32
    %c0_i32_1 = arith.constant 0 : i32
    return %c0_i32, %c0_i32_0 : i32, i32
  }
  func.func @transform_4(%arg0: i32) -> (i32, i32) {
    %c0_i32 = arith.constant 0 : i32
    %c0_i32_0 = arith.constant 0 : i32
    return %arg0, %c0_i32 : i32, i32
  }
}

</mosaic_0001>

<llo_original>
// kernel: rnn_forward.2
$region0: #{rnn_forward.2}
  #allocation0 [shape = 'u32[]', space=smem, size = 0x4, offset = 0x4, fixed_abs, tag = 'smem constant byte address 0x4 - core index']
  #allocation1 [shape = 'u32[72,128]{1,0:T(1,128)}', space=vmem, size = 0x9000, scoped, tag = 'internal scratch']
  #allocation2 [shape = 'f32[2,32]{1,0:T(2,128)}', space=vmem, size = 0x400, scoped, tag = 'scratch operand']
  %s0 = inlined_call_operand.vmem [shape: bf16[16,16], index: 0, kind: input, shape index: {}]
  %s1 = inlined_call_operand.vmem [shape: bf16[16,32], index: 1, kind: input, shape index: {}]
  %s2 = inlined_call_operand.vmem [shape: bf16[32,32], index: 2, kind: input, shape index: {}]
  %s3 = inlined_call_operand.vmem [shape: f32[1,32], index: 3, kind: input, shape index: {}]
  %s4 = inlined_call_operand.vmem [shape: bf16[16,32], index: 4, kind: output, shape index: {}]
  %s5 = sld [smem:[#allocation0]]
  $region30: #{rnn_forward.2} parent=0
    _
  %s7 = ssub.s32 1, %s5
  %s8 = scalar_select 0, %s7, %s5
  // Predicated region
  $region2: #{rnn_forward.2} parent=0 // pred_check
    _
  $region3: #{rnn_forward.2} parent=0 // pred_check_branch
    %10 = sbr.rel (0) target = $region5
  $region4: #{rnn_forward.2} parent=0 // pred_region
    _
  $region5: #{rnn_forward.2} parent=0 // pred_fallthru
    _
  // Predicated region
  $region6: #{rnn_forward.2} parent=0 // pred_check
    _
  $region7: #{rnn_forward.2} parent=0 // pred_check_branch
    %12 = sbr.rel (0) target = $region9
  $region8: #{rnn_forward.2} parent=0 // pred_region
    _
  $region9: #{rnn_forward.2} parent=0 // pred_fallthru
    _
  // Predicated region
  $region10: #{rnn_forward.2} parent=0 // pred_check
    _
  $region11: #{rnn_forward.2} parent=0 // pred_check_branch
    %14 = sbr.rel (0) target = $region13
  $region12: #{rnn_forward.2} parent=0 // pred_region
    _
  $region13: #{rnn_forward.2} parent=0 // pred_fallthru
    _
  // Predicated region
  $region14: #{rnn_forward.2} parent=0 // pred_check
    _
  $region15: #{rnn_forward.2} parent=0 // pred_check_branch
    %16 = sbr.rel (0) target = $region17
  $region16: #{rnn_forward.2} parent=0 // pred_region
    _
  $region17: #{rnn_forward.2} parent=0 // pred_fallthru
    _
  %p18 = scmp.eq.s32.totalorder 0, 0
  // Predicated region
  $region18: #{rnn_forward.2} parent=0 // pred_check
    %p19 = pneg %p18
  $region19: #{rnn_forward.2} parent=0 // pred_check_branch
    %21 = sbr.rel (%p19) target = $region21
  $region20: #{rnn_forward.2} parent=0 // pred_region
    %vm22 = vcmask 254976
    %23 = vst.msk [vmem:[#allocation2] sm:$0x3] %vm22, 0.0
  $region21: #{rnn_forward.2} parent=0 // pred_fallthru
    _
  %v24 = vld [vmem:[%s0] sm:$0xf]
  %v25 = vld [vmem:[%s0 + $0x4] sm:$0xf]
  %v26 = vld [vmem:[%s1] sm:$0xf]
  %v27 = vld [vmem:[%s1 + $0x4] sm:$0xf]
  %v28 = vld [vmem:[%s3] sm:$0x1]
  %v30 = vperm.slane %v28, 0
  %v34 = vunpack.c.l.b16 %v24
  %v35 = vunpack.c.l.b16 %v25
  %v36 = vpack.c.b16 %v35, %v34
  %v39 = vunpack.c.l.b16 %v26
  %v40 = vunpack.c.l.b16 %v27
  %v41 = vpack.c.b16 %v40, %v39
  %vm43 = vcmask 130048
  %v45 = vsel %vm43, %v36, 0
  %47 = vmatpush.bf16.msra.mxu0 0
  %48 = vmatpush.bf16.msra.mxu0 0
  %49 = vmatpush.bf16.msra.mxu0 0
  %50 = vmatpush.bf16.msra.mxu0 0
  %51 = vmatpush.bf16.msra.mxu0 0
  %52 = vmatpush.bf16.msra.mxu0 0
  %53 = vmatpush.bf16.msra.mxu0 0
  %54 = vmatpush.bf16.msra.mxu0 %v41
  %55 = vmatmul.bf16.gmra.mxu0 %v45
  %v56 = vpop.f32.mrf.mxu0
  %v57 = vadd.f32 %v30, %v56
  %v58 = vpop.f32.mrf.mxu0
  %v59 = vadd.f32 %v30, %v58
  %60 = vdwg.mxu0
  %v61 = vld [vmem:[#allocation2] sm:$0x3]
  %v62 = vpack.c.bf16 %v61, %v61
  %v63 = vld [vmem:[%s2] sm:$0xf]
  %v64 = vld [vmem:[%s2 + $0x4] sm:$0xf]
  %v65 = vld [vmem:[%s2 + $0x8] sm:$0xf]
  %v66 = vld [vmem:[%s2 + $0xc] sm:$0xf]
  %v71 = vunpack.c.l.b16 %v63
  %v72 = vunpack.c.l.b16 %v64
  %v73 = vunpack.c.l.b16 %v65
  %v74 = vunpack.c.l.b16 %v66
  %v75 = vpack.c.b16 %v72, %v71
  %v76 = vpack.c.b16 %v74, %v73
  %vm79 = vcmask 261120
  %v81 = vsel %vm79, %v62, 0
  %83 = vmatpush.bf16.msra.mxu0 0
  %84 = vmatpush.bf16.msra.mxu0 0
  %85 = vmatpush.bf16.msra.mxu0 0
  %86 = vmatpush.bf16.msra.mxu0 0
  %87 = vmatpush.bf16.msra.mxu0 0
  %88 = vmatpush.bf16.msra.mxu0 0
  %89 = vmatpush.bf16.msra.mxu0 %v76
  %90 = vmatpush.bf16.msra.mxu0 %v75
  %91 = vmatmul.bf16.gmra.mxu0 %v81
  %v92 = vpop.f32.mrf.mxu0
  %v93 = vadd.f32 0.0, %v92
  %v94 = vpop.f32.mrf.mxu0
  %95 = vdwg.mxu0
  %v96 = vadd.f32 %v57, %v93
  %v97 = vtanh.pop %v96
  %v98 = vpack.c.bf16 %v97, %v97
  %vm99 = vcmask 253952
  %100 = vst.msk [vmem:[%s4] sm:$0x1] %vm99, %v98
  %v101 = vld [vmem:[%s2] sm:$0xf]
  %v102 = vld [vmem:[%s2 + $0x4] sm:$0xf]
  %v103 = vld [vmem:[%s2 + $0x8] sm:$0xf]
  %v104 = vld [vmem:[%s2 + $0xc] sm:$0xf]
  %v109 = vunpack.c.l.b16 %v101
  %v110 = vunpack.c.l.b16 %v102
  %v111 = vunpack.c.l.b16 %v103
  %v112 = vunpack.c.l.b16 %v104
  %v113 = vpack.c.b16 %v110, %v109
  %v114 = vpack.c.b16 %v112, %v111
  %v118 = vsel %vm79, %v98, 0
  %120 = vmatpush.bf16.msra.mxu0 0
  %121 = vmatpush.bf16.msra.mxu0 0
  %122 = vmatpush.bf16.msra.mxu0 0
  %123 = vmatpush.bf16.msra.mxu0 0
  %124 = vmatpush.bf16.msra.mxu0 0
  %125 = vmatpush.bf16.msra.mxu0 0
  %126 = vmatpush.bf16.msra.mxu0 %v114
  %127 = vmatpush.bf16.msra.mxu0 %v113
  %128 = vmatmul.bf16.gmra.mxu0 %v118
  %v129 = vpop.f32.mrf.mxu0
  %v130 = vadd.f32 0.0, %v129
  %v131 = vpop.f32.mrf.mxu0
  %132 = vdwg.mxu0
  %v134 = vrot.slane %v130, 6
  %v136 = vadd.f32 %v57, %v134
  %v137 = vtanh.pop %v136
  %v138 = vpack.c.bf16 %v137, %v137
  %vm139 = vcmask 254977
  %140 = vst.msk [vmem:[%s4] sm:$0x2] %vm139, %v138
  %v141 = vld [vmem:[%s2] sm:$0xf]
  %v142 = vld [vmem:[%s2 + $0x4] sm:$0xf]
  %v143 = vld [vmem:[%s2 + $0x8] sm:$0xf]
  %v144 = vld [vmem:[%s2 + $0xc] sm:$0xf]
  %v146 = vunpack.c.l.b16 %v138
  %v147 = vpack.c.b16 %v146, %v146
  %v148 = vrot.slane %v147, 1
  %v153 = vunpack.c.l.b16 %v141
  %v154 = vunpack.c.l.b16 %v142
  %v155 = vunpack.c.l.b16 %v143
  %v156 = vunpack.c.l.b16 %v144
  %v157 = vpack.c.b16 %v154, %v153
  %v158 = vpack.c.b16 %v156, %v155
  %v162 = vsel %vm79, %v148, 0
  %164 = vmatpush.bf16.msra.mxu0 0
  %165 = vmatpush.bf16.msra.mxu0 0
  %166 = vmatpush.bf16.msra.mxu0 0
  %167 = vmatpush.bf16.msra.mxu0 0
  %168 = vmatpush.bf16.msra.mxu0 0
  %169 = vmatpush.bf16.msra.mxu0 0
  %170 = vmatpush.bf16.msra.mxu0 %v158
  %171 = vmatpush.bf16.msra.mxu0 %v157
  %172 = vmatmul.bf16.gmra.mxu0 %v162
  %v173 = vpop.f32.mrf.mxu0
  %v174 = vadd.f32 0.0, %v173
  %v175 = vpop.f32.mrf.mxu0
  %176 = vdwg.mxu0
  %v178 = vrot.slane %v174, 4
  %v180 = vadd.f32 %v57, %v178
  %v181 = vtanh.pop %v180
  %v182 = vpack.c.bf16 %v181, %v181
  %vm183 = vcmask 256002
  %184 = vst.msk [vmem:[%s4] sm:$0x4] %vm183, %v182
  %v185 = vld [vmem:[%s2] sm:$0xf]
  %v186 = vld [vmem:[%s2 + $0x4] sm:$0xf]
  %v187 = vld [vmem:[%s2 + $0x8] sm:$0xf]
  %v188 = vld [vmem:[%s2 + $0xc] sm:$0xf]
  %v190 = vunpack.c.l.b16 %v182
  %v191 = vpack.c.b16 %v190, %v190
  %v192 = vrot.slane %v191, 2
  %v197 = vunpack.c.l.b16 %v185
  %v198 = vunpack.c.l.b16 %v186
  %v199 = vunpack.c.l.b16 %v187
  %v200 = vunpack.c.l.b16 %v188
  %v201 = vpack.c.b16 %v198, %v197
  %v202 = vpack.c.b16 %v200, %v199
  %v206 = vsel %vm79, %v192, 0
  %208 = vmatpush.bf16.msra.mxu0 0
  %209 = vmatpush.bf16.msra.mxu0 0
  %210 = vmatpush.bf16.msra.mxu0 0
  %211 = vmatpush.bf16.msra.mxu0 0
  %212 = vmatpush.bf16.msra.mxu0 0
  %213 = vmatpush.bf16.msra.mxu0 0
  %214 = vmatpush.bf16.msra.mxu0 %v202
  %215 = vmatpush.bf16.msra.mxu0 %v201
  %216 = vmatmul.bf16.gmra.mxu0 %v206
  %v217 = vpop.f32.mrf.mxu0
  %v218 = vadd.f32 0.0, %v217
  %v219 = vpop.f32.mrf.mxu0
  %220 = vdwg.mxu0
  %v222 = vrot.slane %v218, 2
  %v224 = vadd.f32 %v57, %v222
  %v225 = vtanh.pop %v224
  %v226 = vpack.c.bf16 %v225, %v225
  %vm227 = vcmask 257027
  %228 = vst.msk [vmem:[%s4] sm:$0x8] %vm227, %v226
  %v229 = vld [vmem:[%s2] sm:$0xf]
  %v230 = vld [vmem:[%s2 + $0x4] sm:$0xf]
  %v231 = vld [vmem:[%s2 + $0x8] sm:$0xf]
  %v232 = vld [vmem:[%s2 + $0xc] sm:$0xf]
  %v234 = vunpack.c.l.b16 %v226
  %v235 = vpack.c.b16 %v234, %v234
  %v236 = vrot.slane %v235, 3
  %v241 = vunpack.c.l.b16 %v229
  %v242 = vunpack.c.l.b16 %v230
  %v243 = vunpack.c.l.b16 %v231
  %v244 = vunpack.c.l.b16 %v232
  %v245 = vpack.c.b16 %v242, %v241
  %v246 = vpack.c.b16 %v244, %v243
  %v250 = vsel %vm79, %v236, 0
  %252 = vmatpush.bf16.msra.mxu0 0
  %253 = vmatpush.bf16.msra.mxu0 0
  %254 = vmatpush.bf16.msra.mxu0 0
  %255 = vmatpush.bf16.msra.mxu0 0
  %256 = vmatpush.bf16.msra.mxu0 0
  %257 = vmatpush.bf16.msra.mxu0 0
  %258 = vmatpush.bf16.msra.mxu0 %v246
  %259 = vmatpush.bf16.msra.mxu0 %v245
  %260 = vmatmul.bf16.gmra.mxu0 %v250
  %v261 = vpop.f32.mrf.mxu0
  %v262 = vadd.f32 0.0, %v261
  %v263 = vpop.f32.mrf.mxu0
  %264 = vdwg.mxu0
  %v265 = vadd.f32 %v59, %v262
  %v266 = vtanh.pop %v265
  %v267 = vpack.c.bf16 %v266, %v266
  %268 = vst.msk [vmem:[%s4 + $0x4] sm:$0x1] %vm99, %v267
  %v269 = vld [vmem:[%s2] sm:$0xf]
  %v270 = vld [vmem:[%s2 + $0x4] sm:$0xf]
  %v271 = vld [vmem:[%s2 + $0x8] sm:$0xf]
  %v272 = vld [vmem:[%s2 + $0xc] sm:$0xf]
  %v277 = vunpack.c.l.b16 %v269
  %v278 = vunpack.c.l.b16 %v270
  %v279 = vunpack.c.l.b16 %v271
  %v280 = vunpack.c.l.b16 %v272
  %v281 = vpack.c.b16 %v278, %v277
  %v282 = vpack.c.b16 %v280, %v279
  %v286 = vsel %vm79, %v267, 0
  %288 = vmatpush.bf16.msra.mxu0 0
  %289 = vmatpush.bf16.msra.mxu0 0
  %290 = vmatpush.bf16.msra.mxu0 0
  %291 = vmatpush.bf16.msra.mxu0 0
  %292 = vmatpush.bf16.msra.mxu0 0
  %293 = vmatpush.bf16.msra.mxu0 0
  %294 = vmatpush.bf16.msra.mxu0 %v282
  %295 = vmatpush.bf16.msra.mxu0 %v281
  %296 = vmatmul.bf16.gmra.mxu0 %v286
  %v297 = vpop.f32.mrf.mxu0
  %v298 = vadd.f32 0.0, %v297
  %v299 = vpop.f32.mrf.mxu0
  %300 = vdwg.mxu0
  %v302 = vrot.slane %v298, 6
  %v304 = vadd.f32 %v59, %v302
  %v305 = vtanh.pop %v304
  %v306 = vpack.c.bf16 %v305, %v305
  %307 = vst.msk [vmem:[%s4 + $0x4] sm:$0x2] %vm139, %v306
  %v308 = vld [vmem:[%s2] sm:$0xf]
  %v309 = vld [vmem:[%s2 + $0x4] sm:$0xf]
  %v310 = vld [vmem:[%s2 + $0x8] sm:$0xf]
  %v311 = vld [vmem:[%s2 + $0xc] sm:$0xf]
  %v313 = vunpack.c.l.b16 %v306
  %v314 = vpack.c.b16 %v313, %v313
  %v315 = vrot.slane %v314, 1
  %v320 = vunpack.c.l.b16 %v308
  %v321 = vunpack.c.l.b16 %v309
  %v322 = vunpack.c.l.b16 %v310
  %v323 = vunpack.c.l.b16 %v311
  %v324 = vpack.c.b16 %v321, %v320
  %v325 = vpack.c.b16 %v323, %v322
  %v329 = vsel %vm79, %v315, 0
  %331 = vmatpush.bf16.msra.mxu0 0
  %332 = vmatpush.bf16.msra.mxu0 0
  %333 = vmatpush.bf16.msra.mxu0 0
  %334 = vmatpush.bf16.msra.mxu0 0
  %335 = vmatpush.bf16.msra.mxu0 0
  %336 = vmatpush.bf16.msra.mxu0 0
  %337 = vmatpush.bf16.msra.mxu0 %v325
  %338 = vmatpush.bf16.msra.mxu0 %v324
  %339 = vmatmul.bf16.gmra.mxu0 %v329
  %v340 = vpop.f32.mrf.mxu0
  %v341 = vadd.f32 0.0, %v340
  %v342 = vpop.f32.mrf.mxu0
  %343 = vdwg.mxu0
  %v345 = vrot.slane %v341, 4
  %v347 = vadd.f32 %v59, %v345
  %v348 = vtanh.pop %v347
  %v349 = vpack.c.bf16 %v348, %v348
  %350 = vst.msk [vmem:[%s4 + $0x4] sm:$0x4] %vm183, %v349
  %v351 = vld [vmem:[%s2] sm:$0xf]
  %v352 = vld [vmem:[%s2 + $0x4] sm:$0xf]
  %v353 = vld [vmem:[%s2 + $0x8] sm:$0xf]
  %v354 = vld [vmem:[%s2 + $0xc] sm:$0xf]
  %v356 = vunpack.c.l.b16 %v349
  %v357 = vpack.c.b16 %v356, %v356
  %v358 = vrot.slane %v357, 2
  %v363 = vunpack.c.l.b16 %v351
  %v364 = vunpack.c.l.b16 %v352
  %v365 = vunpack.c.l.b16 %v353
  %v366 = vunpack.c.l.b16 %v354
  %v367 = vpack.c.b16 %v364, %v363
  %v368 = vpack.c.b16 %v366, %v365
  %v372 = vsel %vm79, %v358, 0
  %374 = vmatpush.bf16.msra.mxu0 0
  %375 = vmatpush.bf16.msra.mxu0 0
  %376 = vmatpush.bf16.msra.mxu0 0
  %377 = vmatpush.bf16.msra.mxu0 0
  %378 = vmatpush.bf16.msra.mxu0 0
  %379 = vmatpush.bf16.msra.mxu0 0
  %380 = vmatpush.bf16.msra.mxu0 %v368
  %381 = vmatpush.bf16.msra.mxu0 %v367
  %382 = vmatmul.bf16.gmra.mxu0 %v372
  %v383 = vpop.f32.mrf.mxu0
  %v384 = vadd.f32 0.0, %v383
  %v385 = vpop.f32.mrf.mxu0
  %386 = vdwg.mxu0
  %v388 = vrot.slane %v384, 2
  %v390 = vadd.f32 %v59, %v388
  %v391 = vtanh.pop %v390
  %v392 = vpack.c.bf16 %v391, %v391
  %393 = vst.msk [vmem:[%s4 + $0x4] sm:$0x8] %vm227, %v392
  %vm394 = vcmask 261126
  %395 = vst.msk [vmem:[#allocation2 - $0x6] sm:$0xc0] %vm394, %v391
  // Predicated region
  $region22: #{rnn_forward.2} parent=0 // pred_check
    _
  $region23: #{rnn_forward.2} parent=0 // pred_check_branch
    %397 = sbr.rel (0) target = $region25
  $region24: #{rnn_forward.2} parent=0 // pred_region
    _
  $region25: #{rnn_forward.2} parent=0 // pred_fallthru
    _
  // Predicated region
  $region26: #{rnn_forward.2} parent=0 // pred_check
    _
  $region27: #{rnn_forward.2} parent=0 // pred_check_branch
    %399 = sbr.rel (0) target = $region29
  $region28: #{rnn_forward.2} parent=0 // pred_region
    _
  $region29: #{rnn_forward.2} parent=0 // pred_fallthru
    _

// kernel: rnn_forward.3
$region0: #{rnn_forward.3}
  #allocation0 [shape = 'u32[]', space=smem, size = 0x4, offset = 0x4, fixed_abs, tag = 'smem constant byte address 0x4 - core index']
  #allocation1 [shape = 'u32[72,128]{1,0:T(1,128)}', space=vmem, size = 0x9000, scoped, tag = 'internal scratch']
  #allocation2 [shape = 'f32[2,32]{1,0:T(2,128)}', space=vmem, size = 0x400, scoped, tag = 'scratch operand']
  %s0 = inlined_call_operand.vmem [shape: bf16[16,32], index: 0, kind: input, shape index: {}]
  %s1 = inlined_call_operand.vmem [shape: bf16[32,32], index: 1, kind: input, shape index: {}]
  %s2 = inlined_call_operand.vmem [shape: bf16[32,32], index: 2, kind: input, shape index: {}]
  %s3 = inlined_call_operand.vmem [shape: f32[1,32], index: 3, kind: input, shape index: {}]
  %s4 = inlined_call_operand.vmem [shape: f32[32,8], index: 4, kind: input, shape index: {}]
  %s5 = inlined_call_operand.vmem [shape: f32[1,8], index: 5, kind: input, shape index: {}]
  %s6 = inlined_call_operand.hbm [shape: f32[2,8], index: 6, kind: output, shape index: {}]
  %s7 = sld [smem:[#allocation0]]
  $region42: #{rnn_forward.3} parent=0
    _
  %s9 = ssub.s32 1, %s7
  %s10 = scalar_select 0, %s9, %s7
  $region1: #{rnn_forward.3} parent=0
    #allocation3 [shape = 'u8[1024]{0}', space=vmem, size = 0x400, scoped, tag = 'output window, operand 0, single buffered']
    #allocation4 [shape = 's32[1]{0}', space=sflag, size = 0x4, scoped, tag = 'scoped memory for rnn_forward.3']
    %11 = vsyncpa [#allocation4], 0
    // Predicated region
    $region2: #{rnn_forward.3} parent=1 // pred_check
      _
    $region3: #{rnn_forward.3} parent=1 // pred_check_branch
      %13 = sbr.rel (0) target = $region5
    $region4: #{rnn_forward.3} parent=1 // pred_region
      _
    $region5: #{rnn_forward.3} parent=1 // pred_fallthru
      _
    // Predicated region
    $region6: #{rnn_forward.3} parent=1 // pred_check
      _
    $region7: #{rnn_forward.3} parent=1 // pred_check_branch
      %15 = sbr.rel (0) target = $region9
    $region8: #{rnn_forward.3} parent=1 // pred_region
      _
    $region9: #{rnn_forward.3} parent=1 // pred_fallthru
      _
    // Predicated region
    $region10: #{rnn_forward.3} parent=1 // pred_check
      _
    $region11: #{rnn_forward.3} parent=1 // pred_check_branch
      %17 = sbr.rel (0) target = $region13
    $region12: #{rnn_forward.3} parent=1 // pred_region
      _
    $region13: #{rnn_forward.3} parent=1 // pred_fallthru
      _
    // Predicated region
    $region14: #{rnn_forward.3} parent=1 // pred_check
      _
    $region15: #{rnn_forward.3} parent=1 // pred_check_branch
      %19 = sbr.rel (0) target = $region17
    $region16: #{rnn_forward.3} parent=1 // pred_region
      _
    $region17: #{rnn_forward.3} parent=1 // pred_fallthru
      _
    // Predicated region
    $region18: #{rnn_forward.3} parent=1 // pred_check
      _
    $region19: #{rnn_forward.3} parent=1 // pred_check_branch
      %21 = sbr.rel (0) target = $region21
    $region20: #{rnn_forward.3} parent=1 // pred_region
      _
    $region21: #{rnn_forward.3} parent=1 // pred_fallthru
      _
    // Predicated region
    $region22: #{rnn_forward.3} parent=1 // pred_check
      _
    $region23: #{rnn_forward.3} parent=1 // pred_check_branch
      %23 = sbr.rel (0) target = $region25
    $region24: #{rnn_forward.3} parent=1 // pred_region
      _
    $region25: #{rnn_forward.3} parent=1 // pred_fallthru
      _
    %p25 = scmp.eq.s32.totalorder 0, 0
    // Predicated region
    $region26: #{rnn_forward.3} parent=1 // pred_check
      %p26 = pneg %p25
    $region27: #{rnn_forward.3} parent=1 // pred_check_branch
      %28 = sbr.rel (%p26) target = $region29
    $region28: #{rnn_forward.3} parent=1 // pred_region
      %vm29 = vcmask 254976
      %30 = vst.msk [vmem:[#allocation2] sm:$0x3] %vm29, 0.0
    $region29: #{rnn_forward.3} parent=1 // pred_fallthru
      _
    %v31 = vld [vmem:[%s0] sm:$0xf]
    %v32 = vld [vmem:[%s0 + $0x4] sm:$0xf]
    %v33 = vld [vmem:[%s1] sm:$0xf]
    %v34 = vld [vmem:[%s1 + $0x4] sm:$0xf]
    %v35 = vld [vmem:[%s1 + $0x8] sm:$0xf]
    %v36 = vld [vmem:[%s1 + $0xc] sm:$0xf]
    %v37 = vld [vmem:[%s3] sm:$0x1]
    %v39 = vperm.slane %v37, 0
    %v43 = vunpack.c.l.b16 %v31
    %v44 = vunpack.c.l.b16 %v32
    %v45 = vpack.c.b16 %v44, %v43
    %v50 = vunpack.c.l.b16 %v33
    %v51 = vunpack.c.l.b16 %v34
    %v52 = vunpack.c.l.b16 %v35
    %v53 = vunpack.c.l.b16 %v36
    %v54 = vpack.c.b16 %v51, %v50
    %v55 = vpack.c.b16 %v53, %v52
    %vm58 = vcmask 261120
    %v60 = vsel %vm58, %v45, 0
    %62 = vmatpush.bf16.msra.mxu0 0
    %63 = vmatpush.bf16.msra.mxu0 0
    %64 = vmatpush.bf16.msra.mxu0 0
    %65 = vmatpush.bf16.msra.mxu0 0
    %66 = vmatpush.bf16.msra.mxu0 0
    %67 = vmatpush.bf16.msra.mxu0 0
    %68 = vmatpush.bf16.msra.mxu0 %v55
    %69 = vmatpush.bf16.msra.mxu0 %v54
    %70 = vmatmul.bf16.gmra.mxu0 %v60
    %v71 = vpop.f32.mrf.mxu0
    %v72 = vadd.f32 %v39, %v71
    %v73 = vpop.f32.mrf.mxu0
    %v74 = vadd.f32 %v39, %v73
    %75 = vdwg.mxu0
    %v76 = vld [vmem:[#allocation2] sm:$0x3]
    %v77 = vpack.c.bf16 %v76, %v76
    %v78 = vld [vmem:[%s2] sm:$0xf]
    %v79 = vld [vmem:[%s2 + $0x4] sm:$0xf]
    %v80 = vld [vmem:[%s2 + $0x8] sm:$0xf]
    %v81 = vld [vmem:[%s2 + $0xc] sm:$0xf]
    %v86 = vunpack.c.l.b16 %v78
    %v87 = vunpack.c.l.b16 %v79
    %v88 = vunpack.c.l.b16 %v80
    %v89 = vunpack.c.l.b16 %v81
    %v90 = vpack.c.b16 %v87, %v86
    %v91 = vpack.c.b16 %v89, %v88
    %v95 = vsel %vm58, %v77, 0
    %97 = vmatpush.bf16.msra.mxu0 0
    %98 = vmatpush.bf16.msra.mxu0 0
    %99 = vmatpush.bf16.msra.mxu0 0
    %100 = vmatpush.bf16.msra.mxu0 0
    %101 = vmatpush.bf16.msra.mxu0 0
    %102 = vmatpush.bf16.msra.mxu0 0
    %103 = vmatpush.bf16.msra.mxu0 %v91
    %104 = vmatpush.bf16.msra.mxu0 %v90
    %105 = vmatmul.bf16.gmra.mxu0 %v95
    %v106 = vpop.f32.mrf.mxu0
    %v107 = vadd.f32 0.0, %v106
    %v108 = vpop.f32.mrf.mxu0
    %109 = vdwg.mxu0
    %v110 = vadd.f32 %v72, %v107
    %v111 = vtanh.pop %v110
    %v112 = vpack.c.bf16 %v111, %v111
    %v114 = vsel %vm58, %v112, 0
    %116 = vmatpush.bf16.msra.mxu0 0
    %117 = vmatpush.bf16.msra.mxu0 0
    %118 = vmatpush.bf16.msra.mxu0 0
    %119 = vmatpush.bf16.msra.mxu0 0
    %120 = vmatpush.bf16.msra.mxu0 0
    %121 = vmatpush.bf16.msra.mxu0 0
    %122 = vmatpush.bf16.msra.mxu0 %v91
    %123 = vmatpush.bf16.msra.mxu0 %v90
    %124 = vmatmul.bf16.gmra.mxu0 %v114
    %v125 = vpop.f32.mrf.mxu0
    %v126 = vadd.f32 0.0, %v125
    %v127 = vpop.f32.mrf.mxu0
    %128 = vdwg.mxu0
    %v130 = vrot.slane %v126, 6
    %v132 = vadd.f32 %v72, %v130
    %v133 = vtanh.pop %v132
    %v134 = vpack.c.bf16 %v133, %v133
    %v136 = vrot.slane %v134, 1
    %v138 = vsel %vm58, %v136, 0
    %140 = vmatpush.bf16.msra.mxu0 0
    %141 = vmatpush.bf16.msra.mxu0 0
    %142 = vmatpush.bf16.msra.mxu0 0
    %143 = vmatpush.bf16.msra.mxu0 0
    %144 = vmatpush.bf16.msra.mxu0 0
    %145 = vmatpush.bf16.msra.mxu0 0
    %146 = vmatpush.bf16.msra.mxu0 %v91
    %147 = vmatpush.bf16.msra.mxu0 %v90
    %148 = vmatmul.bf16.gmra.mxu0 %v138
    %v149 = vpop.f32.mrf.mxu0
    %v150 = vadd.f32 0.0, %v149
    %v151 = vpop.f32.mrf.mxu0
    %152 = vdwg.mxu0
    %v154 = vrot.slane %v150, 4
    %v156 = vadd.f32 %v72, %v154
    %v157 = vtanh.pop %v156
    %v158 = vpack.c.bf16 %v157, %v157
    %v160 = vrot.slane %v158, 2
    %v162 = vsel %vm58, %v160, 0
    %164 = vmatpush.bf16.msra.mxu0 0
    %165 = vmatpush.bf16.msra.mxu0 0
    %166 = vmatpush.bf16.msra.mxu0 0
    %167 = vmatpush.bf16.msra.mxu0 0
    %168 = vmatpush.bf16.msra.mxu0 0
    %169 = vmatpush.bf16.msra.mxu0 0
    %170 = vmatpush.bf16.msra.mxu0 %v91
    %171 = vmatpush.bf16.msra.mxu0 %v90
    %172 = vmatmul.bf16.gmra.mxu0 %v162
    %v173 = vpop.f32.mrf.mxu0
    %v174 = vadd.f32 0.0, %v173
    %v175 = vpop.f32.mrf.mxu0
    %176 = vdwg.mxu0
    %v178 = vrot.slane %v174, 2
    %v180 = vadd.f32 %v72, %v178
    %v181 = vtanh.pop %v180
    %v182 = vpack.c.bf16 %v181, %v181
    %v184 = vrot.slane %v182, 3
    %v186 = vsel %vm58, %v184, 0
    %188 = vmatpush.bf16.msra.mxu0 0
    %189 = vmatpush.bf16.msra.mxu0 0
    %190 = vmatpush.bf16.msra.mxu0 0
    %191 = vmatpush.bf16.msra.mxu0 0
    %192 = vmatpush.bf16.msra.mxu0 0
    %193 = vmatpush.bf16.msra.mxu0 0
    %194 = vmatpush.bf16.msra.mxu0 %v91
    %195 = vmatpush.bf16.msra.mxu0 %v90
    %196 = vmatmul.bf16.gmra.mxu0 %v186
    %v197 = vpop.f32.mrf.mxu0
    %v198 = vadd.f32 0.0, %v197
    %v199 = vpop.f32.mrf.mxu0
    %200 = vdwg.mxu0
    %v201 = vadd.f32 %v74, %v198
    %v202 = vtanh.pop %v201
    %v203 = vpack.c.bf16 %v202, %v202
    %v205 = vsel %vm58, %v203, 0
    %207 = vmatpush.bf16.msra.mxu0 0
    %208 = vmatpush.bf16.msra.mxu0 0
    %209 = vmatpush.bf16.msra.mxu0 0
    %210 = vmatpush.bf16.msra.mxu0 0
    %211 = vmatpush.bf16.msra.mxu0 0
    %212 = vmatpush.bf16.msra.mxu0 0
    %213 = vmatpush.bf16.msra.mxu0 %v91
    %214 = vmatpush.bf16.msra.mxu0 %v90
    %215 = vmatmul.bf16.gmra.mxu0 %v205
    %v216 = vpop.f32.mrf.mxu0
    %v217 = vadd.f32 0.0, %v216
    %v218 = vpop.f32.mrf.mxu0
    %219 = vdwg.mxu0
    %v221 = vrot.slane %v217, 6
    %v223 = vadd.f32 %v74, %v221
    %v224 = vtanh.pop %v223
    %v225 = vpack.c.bf16 %v224, %v224
    %v227 = vrot.slane %v225, 1
    %v229 = vsel %vm58, %v227, 0
    %231 = vmatpush.bf16.msra.mxu0 0
    %232 = vmatpush.bf16.msra.mxu0 0
    %233 = vmatpush.bf16.msra.mxu0 0
    %234 = vmatpush.bf16.msra.mxu0 0
    %235 = vmatpush.bf16.msra.mxu0 0
    %236 = vmatpush.bf16.msra.mxu0 0
    %237 = vmatpush.bf16.msra.mxu0 %v91
    %238 = vmatpush.bf16.msra.mxu0 %v90
    %239 = vmatmul.bf16.gmra.mxu0 %v229
    %v240 = vpop.f32.mrf.mxu0
    %v241 = vadd.f32 0.0, %v240
    %v242 = vpop.f32.mrf.mxu0
    %243 = vdwg.mxu0
    %v245 = vrot.slane %v241, 4
    %v247 = vadd.f32 %v74, %v245
    %v248 = vtanh.pop %v247
    %v249 = vpack.c.bf16 %v248, %v248
    %v251 = vrot.slane %v249, 2
    %v253 = vsel %vm58, %v251, 0
    %255 = vmatpush.bf16.msra.mxu0 0
    %256 = vmatpush.bf16.msra.mxu0 0
    %257 = vmatpush.bf16.msra.mxu0 0
    %258 = vmatpush.bf16.msra.mxu0 0
    %259 = vmatpush.bf16.msra.mxu0 0
    %260 = vmatpush.bf16.msra.mxu0 0
    %261 = vmatpush.bf16.msra.mxu0 %v91
    %262 = vmatpush.bf16.msra.mxu0 %v90
    %263 = vmatmul.bf16.gmra.mxu0 %v253
    %v264 = vpop.f32.mrf.mxu0
    %v265 = vadd.f32 0.0, %v264
    %v266 = vpop.f32.mrf.mxu0
    %267 = vdwg.mxu0
    %v269 = vrot.slane %v265, 2
    %v271 = vadd.f32 %v74, %v269
    %v272 = vtanh.pop %v271
    %vm273 = vcmask 261126
    %274 = vst.msk [vmem:[#allocation2 - $0x6] sm:$0xc0] %vm273, %v272
    // Predicated region
    $region30: #{rnn_forward.3} parent=1 // pred_check
      %p275 = pneg %p25
    $region31: #{rnn_forward.3} parent=1 // pred_check_branch
      %277 = sbr.rel (%p275) target = $region33
    $region32: #{rnn_forward.3} parent=1 // pred_region
      %v278 = vld [vmem:[%s4] sm:$0xff]
      %v279 = vld [vmem:[%s4 + $0x8] sm:$0xff]
      %v280 = vld [vmem:[%s4 + $0x10] sm:$0xff]
      %v281 = vld [vmem:[%s4 + $0x18] sm:$0xff]
      %v282 = vld [vmem:[%s5] sm:$0x1]
      %v284 = vperm.slane %v282, 0
      %v287 = vrot.slane %v272, 6
      %v288 = vsel %vm58, %v287, 0
      %290 = vmatpush.msra.mxu0 0.0
      %291 = vmatpush.msra.mxu0 0.0
      %292 = vmatpush.msra.mxu0 0.0
      %293 = vmatpush.msra.mxu0 0.0
      %294 = vmatpush.msra.mxu0 0.0
      %295 = vmatpush.msra.mxu0 0.0
      %296 = vmatpush.msra.mxu0 0.0
      %297 = vmatpush.msra.mxu0 0.0
      %298 = vmatpush.msra.mxu0 0.0
      %299 = vmatpush.msra.mxu0 0.0
      %300 = vmatpush.msra.mxu0 0.0
      %301 = vmatpush.msra.mxu0 0.0
      %302 = vmatpush.msra.mxu0 %v281
      %303 = vmatpush.msra.mxu0 %v280
      %304 = vmatpush.msra.mxu0 %v279
      %305 = vmatpush.msra.mxu0 %v278
      %306 = vmatmul.f32.gmra.mxu0 %v288
      %v307 = vpop.f32.mrf.mxu0
      %v308 = vadd.f32 %v284, %v307
      %309 = vdwg.mxu0
      %vm310 = vcmask 58368
      %311 = vst.msk [vmem:[#allocation3] sm:$0x3] %vm310, %v308
    $region33: #{rnn_forward.3} parent=1 // pred_fallthru
      _
    // Predicated region
    $region34: #{rnn_forward.3} parent=1 // pred_check
      _
    $region35: #{rnn_forward.3} parent=1 // pred_check_branch
      %313 = sbr.rel (0) target = $region37
    $region36: #{rnn_forward.3} parent=1 // pred_region
      %315 = vsyncadd [#allocation4], 0
      %s317 = sshll.u32 [#allocation3], 4
      %s318 = int_to_ptr.vmem [resolvable:$true] %s317
      %s319 = sshll.u32 %s6, 4
      %s320 = int_to_ptr.hbm [resolvable:$true] %s319
      %322 = dma.vmem_to_hbm [thread:$0]  %s318, 32, %s320, [#allocation4]
    $region37: #{rnn_forward.3} parent=1 // pred_fallthru
      _
    // Predicated region
    $region38: #{rnn_forward.3} parent=1 // pred_check
      _
    $region39: #{rnn_forward.3} parent=1 // pred_check_branch
      %324 = sbr.rel (0) target = $region41
    $region40: #{rnn_forward.3} parent=1 // pred_region
      %326 = dma.done [#allocation4], 32
    $region41: #{rnn_forward.3} parent=1 // pred_fallthru
      _
    %327 = vsyncpa [#allocation4], 1

</llo_original>
